<compile_context>
chip_gen: v5e
topology: v5e:2x2
jax: 0.10.0
libtpu: 0.0.40
codegen_flags: <defaults>
</compile_context>

<pallas_src>
import jax
import jax.numpy as jnp
import numpy as np
from jax.experimental import pallas as pl
from jax.experimental.pallas import tpu as pltpu

D_IN = 2             # forward hard-codes 2-D inputs (nn.Linear(2, 2, bias=False))
N_FREQ = 2           # mask (1, n_freq) must broadcast against sin(y) (last dim 2)
D_OUT = N_FREQ + D_IN  # concat([sin(y) (2 rows), xi (2 rows)]) -> 4 feature rows
LANES = 128


def _round_up(x, m):
    return ((x + m - 1) // m) * m


def input_mapping_kernel(bw_ref, mask_ref, x_ref, out_ref):
    """Dense-vreg tile: x_ref (2, TS, 128) f32 -> out_ref (4, TS, 128) f32.

    nn.Linear(2, 2, bias=False): y = x @ W.T, i.e.
        y0 = W[0,0]*x0 + W[0,1]*x1 ;  y1 = W[1,0]*x0 + W[1,1]*x1
    done as VPU scalar*vector FMAs on full (TS,128) slabs; sin on the EUP;
    weights/mask are 1-D SMEM scalars (no MXU, no concatenate).
    """
    x = x_ref[...]                     # (2, TS, 128)
    x0 = x[0]                          # (TS, 128) — full (8,128) vregs
    x1 = x[1]

    w00 = bw_ref[0]                    # SMEM scalar reads (W flattened row-major)
    w01 = bw_ref[1]
    w10 = bw_ref[2]
    w11 = bw_ref[3]
    m0 = mask_ref[0]
    m1 = mask_ref[1]

    out_ref[0] = jnp.sin(w00 * x0 + w01 * x1) * m0
    out_ref[1] = jnp.sin(w10 * x0 + w11 * x1) * m1
    out_ref[2:4] = x                   # pass-through half: plain full-tile stores


def _pick_block_rows(nb):
    """Rows-of-128 per grid step.

    Aim for grid >= 2 (so v7x megacore shards the 'parallel' axis), cap at 1024
    (double-buffered in+out = 6 MiB, under v5e's 16 MiB scoped-VMEM default,
    and 131072 elements/step amortizes the ~0.35 us per-step overhead on v6e).
    """
    ts = _round_up(max(1, pl.cdiv(nb, 2)), 8)
    ts = min(ts, 1024)
    ts = min(ts, _round_up(nb, 8))     # never bigger than the (padded) data
    return max(ts, 8)


def input_mapping_fm(xt, b_weight, mask, *, block_rows=None):
    """Recommended transpose-free path.  xt: (2, N) feature-major -> (4, N)."""
    d, n = xt.shape
    assert d == D_IN
    xt = xt.astype(jnp.float32)

    n_pad = _round_up(n, LANES)
    if n_pad != n:
        xt = jnp.pad(xt, ((0, 0), (0, n_pad - n)))   # ragged tail -> pad to 128
    nb = n_pad // LANES
    x3 = xt.reshape(D_IN, nb, LANES)                 # free, contiguous reshape

    ts = _pick_block_rows(nb) if block_rows is None else block_rows
    grid = (pl.cdiv(nb, ts),)

    bw_flat = b_weight.reshape(-1).astype(jnp.float32)   # (4,) row-major W
    mask_flat = mask.reshape(-1).astype(jnp.float32)     # (2,)

    cost = pl.CostEstimate(flops=10 * n,                 # 4 mul + 2 add + 2 scale (+slack)
                           transcendentals=2 * n,        # two sin per row
                           bytes_accessed=(D_IN + D_OUT) * 4 * n)  # 24 B/row

    out3 = pl.pallas_call(
        input_mapping_kernel,
        out_shape=jax.ShapeDtypeStruct((D_OUT, nb, LANES), jnp.float32),
        grid_spec=pltpu.PrefetchScalarGridSpec(
            num_scalar_prefetch=0,
            grid=grid,
            in_specs=[
                pl.BlockSpec(memory_space=pltpu.MemorySpace.SMEM),  # W flat (4,)
                pl.BlockSpec(memory_space=pltpu.MemorySpace.SMEM),  # mask (2,)
                pl.BlockSpec((D_IN, ts, LANES), lambda i: (0, i, 0)),
            ],
            out_specs=pl.BlockSpec((D_OUT, ts, LANES), lambda i: (0, i, 0)),
        ),
        compiler_params=pltpu.CompilerParams(
            dimension_semantics=("parallel",)),          # megacore sharding on v7x
        cost_estimate=cost,
    )(bw_flat, mask_flat, x3)

    out = out3.reshape(D_OUT, n_pad)
    return out if n_pad == n else out[:, :n]


def input_mapping_forward(xi, b_weight, mask, *, block_rows=None):
    """Row-major adapter matching the PyTorch interface: xi (N, 2) -> (N, 4).

    NOTE: the .T on each side materializes as XLA copies outside the kernel
    (~48 B/row extra HBM traffic vs. the kernel's 24 B/row).  Prefer
    `input_mapping_fm` end-to-end (the downstream Linear can transpose its
    weight instead) or fuse this op into the consumer kernel.
    """
    return input_mapping_fm(xi.T, b_weight, mask, block_rows=block_rows).T


def reference_forward(xi, b_weight, mask):
    y = xi.astype(jnp.float32) @ b_weight.T
    return jnp.concatenate([jnp.sin(y) * mask, xi.astype(jnp.float32)], axis=-1)


if __name__ == "__main__":
    key = jax.random.PRNGKey(0)
    k_x, k_w, k_x2 = jax.random.split(key, 3)

    # Deterministic synthetic parameters (shapes per module __init__ / forward).
    # B = nn.Linear(2, 2, bias=False) -> weight shape (2, 2)
    b_weight = jax.random.normal(k_w, (D_IN, D_IN), dtype=jnp.float32) * 0.5
    # mask = nn.Parameter(torch.ones(1, n_freq))
    mask = jnp.ones((1, N_FREQ), dtype=jnp.float32)

    # 1) Row-major interface (matches the PyTorch module); ragged N exercises
    #    the pad-to-128 tail path.
    N = 300
    xi = jax.random.normal(k_x, (N, D_IN), dtype=jnp.float32)
    out = jax.block_until_ready(input_mapping_forward(xi, b_weight, mask))
    ref = reference_forward(xi, b_weight, mask)
    np.testing.assert_allclose(np.asarray(out), np.asarray(ref),
                               rtol=1e-5, atol=1e-5)

    # 2) Feature-major (recommended, transpose-free) path; N a multiple of 128
    #    so no padding, and large enough that the grid has >= 2 steps.
    N2 = 3072
    xi2 = jax.random.normal(k_x2, (N2, D_IN), dtype=jnp.float32)
    out_fm = jax.block_until_ready(input_mapping_fm(xi2.T, b_weight, mask))
    ref_fm = reference_forward(xi2, b_weight, mask).T
    np.testing.assert_allclose(np.asarray(out_fm), np.asarray(ref_fm),
                               rtol=1e-5, atol=1e-5)

    print("KERNEL_OK")
</pallas_src>

<mosaic_0001>
module attributes {stable_mosaic.version = 11 : i64} {
  func.func @input_mapping_kernel(%arg0: i32, %arg1: memref<4xf32, #tpu.memory_space<smem>>, %arg2: memref<2xf32, #tpu.memory_space<smem>>, %arg3: memref<2x8x128xf32, #tpu.memory_space<vmem>>, %arg4: memref<4x8x128xf32, #tpu.memory_space<vmem>>) attributes {dimension_semantics = [#tpu.dimension_semantics<parallel>], iteration_bounds = array<i64: 1>, scalar_prefetch = 0 : i64, scratch_operands = 0 : i64, tpu.core_type = #tpu.core_type<tc>, window_params = [{transform_indices = @transform_0, window_bounds = array<i64: 4>}, {transform_indices = @transform_1, window_bounds = array<i64: 2>}, {transform_indices = @transform_2, window_bounds = array<i64: 2, 8, 128>}, {transform_indices = @transform_3, window_bounds = array<i64: 4, 8, 128>}]} {
    %c0 = arith.constant 0 : index
    %c0_0 = arith.constant 0 : index
    %c0_1 = arith.constant 0 : index
    %0 = vector.load %arg3[%c0, %c0_0, %c0_1] : memref<2x8x128xf32, #tpu.memory_space<vmem>>, vector<2x8x128xf32>
    %1 = vector.extract_strided_slice %0 {offsets = [0, 0, 0], sizes = [1, 8, 128], strides = [1, 1, 1]} : vector<2x8x128xf32> to vector<1x8x128xf32>
    %2 = vector.shape_cast %1 : vector<1x8x128xf32> to vector<8x128xf32>
    %3 = vector.extract_strided_slice %0 {offsets = [1, 0, 0], sizes = [1, 8, 128], strides = [1, 1, 1]} : vector<2x8x128xf32> to vector<1x8x128xf32>
    %4 = vector.shape_cast %3 : vector<1x8x128xf32> to vector<8x128xf32>
    %c0_2 = arith.constant 0 : index
    %5 = memref.load %arg1[%c0_2] : memref<4xf32, #tpu.memory_space<smem>>
    %c1 = arith.constant 1 : index
    %6 = memref.load %arg1[%c1] : memref<4xf32, #tpu.memory_space<smem>>
    %c2 = arith.constant 2 : index
    %7 = memref.load %arg1[%c2] : memref<4xf32, #tpu.memory_space<smem>>
    %c3 = arith.constant 3 : index
    %8 = memref.load %arg1[%c3] : memref<4xf32, #tpu.memory_space<smem>>
    %c0_3 = arith.constant 0 : index
    %9 = memref.load %arg2[%c0_3] : memref<2xf32, #tpu.memory_space<smem>>
    %c1_4 = arith.constant 1 : index
    %10 = memref.load %arg2[%c1_4] : memref<2xf32, #tpu.memory_space<smem>>
    %11 = vector.broadcast %5 : f32 to vector<8x128xf32>
    %12 = arith.mulf %11, %2 : vector<8x128xf32>
    %13 = vector.broadcast %6 : f32 to vector<8x128xf32>
    %14 = arith.mulf %13, %4 : vector<8x128xf32>
    %15 = arith.addf %12, %14 : vector<8x128xf32>
    %16 = math.sin %15 : vector<8x128xf32>
    %17 = vector.broadcast %9 : f32 to vector<8x128xf32>
    %18 = arith.mulf %16, %17 : vector<8x128xf32>
    %c0_5 = arith.constant 0 : index
    %c0_6 = arith.constant 0 : index
    %c0_7 = arith.constant 0 : index
    %19 = vector.load %arg4[%c0_5, %c0_6, %c0_7] : memref<4x8x128xf32, #tpu.memory_space<vmem>>, vector<1x8x128xf32>
    %20 = vector.shape_cast %19 : vector<1x8x128xf32> to vector<8x128xf32>
    %21 = vector.shape_cast %18 : vector<8x128xf32> to vector<1x8x128xf32>
    tpu.vector_store %arg4[%c0_5, %c0_6, %c0_7], %21 {strides = array<i32>} : memref<4x8x128xf32, #tpu.memory_space<vmem>>, vector<1x8x128xf32>,
    %22 = vector.broadcast %7 : f32 to vector<8x128xf32>
    %23 = arith.mulf %22, %2 : vector<8x128xf32>
    %24 = vector.broadcast %8 : f32 to vector<8x128xf32>
    %25 = arith.mulf %24, %4 : vector<8x128xf32>
    %26 = arith.addf %23, %25 : vector<8x128xf32>
    %27 = math.sin %26 : vector<8x128xf32>
    %28 = vector.broadcast %10 : f32 to vector<8x128xf32>
    %29 = arith.mulf %27, %28 : vector<8x128xf32>
    %c1_8 = arith.constant 1 : index
    %c0_9 = arith.constant 0 : index
    %c0_10 = arith.constant 0 : index
    %30 = vector.load %arg4[%c1_8, %c0_9, %c0_10] : memref<4x8x128xf32, #tpu.memory_space<vmem>>, vector<1x8x128xf32>
    %31 = vector.shape_cast %30 : vector<1x8x128xf32> to vector<8x128xf32>
    %32 = vector.shape_cast %29 : vector<8x128xf32> to vector<1x8x128xf32>
    tpu.vector_store %arg4[%c1_8, %c0_9, %c0_10], %32 {strides = array<i32>} : memref<4x8x128xf32, #tpu.memory_space<vmem>>, vector<1x8x128xf32>,
    %c2_11 = arith.constant 2 : index
    %c0_12 = arith.constant 0 : index
    %c0_13 = arith.constant 0 : index
    %33 = vector.load %arg4[%c2_11, %c0_12, %c0_13] : memref<4x8x128xf32, #tpu.memory_space<vmem>>, vector<2x8x128xf32>
    tpu.vector_store %arg4[%c2_11, %c0_12, %c0_13], %0 {strides = array<i32>} : memref<4x8x128xf32, #tpu.memory_space<vmem>>, vector<2x8x128xf32>,
    return
  }
  func.func @transform_0(%arg0: i32) -> i32 {
    %c0_i32 = arith.constant 0 : i32
    %c0_i32_0 = arith.constant 0 : i32
    return %c0_i32 : i32
  }
  func.func @transform_1(%arg0: i32) -> i32 {
    %c0_i32 = arith.constant 0 : i32
    %c0_i32_0 = arith.constant 0 : i32
    return %c0_i32 : i32
  }
  func.func @transform_2(%arg0: i32) -> (i32, i32, i32) {
    %c0_i32 = arith.constant 0 : i32
    %c0_i32_0 = arith.constant 0 : i32
    %c0_i32_1 = arith.constant 0 : i32
    return %c0_i32, %arg0, %c0_i32_0 : i32, i32, i32
  }
  func.func @transform_3(%arg0: i32) -> (i32, i32, i32) {
    %c0_i32 = arith.constant 0 : i32
    %c0_i32_0 = arith.constant 0 : i32
    %c0_i32_1 = arith.constant 0 : i32
    return %c0_i32, %arg0, %c0_i32_0 : i32, i32, i32
  }
}

</mosaic_0001>

<llo_original>
// kernel: tpu_custom_call.1
$region0: #{tpu_custom_call.1}
  #allocation0 [shape = 'u32[]', space=smem, size = 0x4, offset = 0x4, fixed_abs, tag = 'smem constant byte address 0x4 - core index']
  #allocation1 [shape = 'u32[72,128]{1,0:T(1,128)}', space=vmem, size = 0x9000, scoped, tag = 'internal scratch']
  %s0 = inlined_call_operand.vmem [shape: f32[4], index: 0, kind: input, shape index: {}]
  %s1 = inlined_call_operand.vmem [shape: f32[2], index: 1, kind: input, shape index: {}]
  %s2 = inlined_call_operand.vmem [shape: f32[2,3,128], index: 2, kind: input, shape index: {}]
  %s3 = inlined_call_operand.vmem [shape: f32[4,3,128], index: 3, kind: output, shape index: {}]
  %s4 = sld [smem:[#allocation0]]
  $region108: #{tpu_custom_call.1} parent=0
    _
  %s6 = ssub.s32 1, %s4
  %s7 = scalar_select 0, %s6, %s4
  $region1: #{tpu_custom_call.1} parent=0
    #allocation2 [shape = 'u8[512]{0}', space=smem, size = 0x200, scoped, tag = 'input window, operand 0, single buffered']
    #allocation3 [shape = 's32[1]{0}', space=sflag, size = 0x4, scoped, tag = 'scoped memory for tpu_custom_call.1']
    #allocation4 [shape = 'u8[512]{0}', space=smem, size = 0x200, scoped, tag = 'input window, operand 1, single buffered']
    #allocation5 [shape = 's32[1]{0}', space=sflag, size = 0x4, scoped, tag = 'scoped memory for tpu_custom_call.1']
    #allocation6 [shape = 'u8[8192]{0}', space=vmem, size = 0x2000, scoped, tag = 'input window, operand 2, single buffered']
    #allocation7 [shape = 'u8[16384]{0}', space=vmem, size = 0x4000, scoped, tag = 'output window, operand 0, single buffered']
    %8 = vsyncpa [#allocation3], 0
    %9 = vsyncpa [#allocation5], 0
    // Predicated region
    $region2: #{tpu_custom_call.1} parent=1 // pred_check
      _
    $region3: #{tpu_custom_call.1} parent=1 // pred_check_branch
      %11 = sbr.rel (0) target = $region5
    $region4: #{tpu_custom_call.1} parent=1 // pred_region
      %13 = vsyncadd [#allocation3], 0
      %s15 = sshll.u32 %s0, 4
      %s16 = int_to_ptr.vmem [resolvable:$true] %s15
      %18 = dma.vmem_to_smem %s16, 16, [#allocation2], [#allocation3]
    $region5: #{tpu_custom_call.1} parent=1 // pred_fallthru
      _
    // Predicated region
    $region6: #{tpu_custom_call.1} parent=1 // pred_check
      _
    $region7: #{tpu_custom_call.1} parent=1 // pred_check_branch
      %20 = sbr.rel (0) target = $region9
    $region8: #{tpu_custom_call.1} parent=1 // pred_region
      %22 = vsyncadd [#allocation5], 0
      %s24 = sshll.u32 %s1, 4
      %s25 = int_to_ptr.vmem [resolvable:$true] %s24
      %27 = dma.vmem_to_smem %s25, 16, [#allocation4], [#allocation5]
    $region9: #{tpu_custom_call.1} parent=1 // pred_fallthru
      _
    // Predicated region
    $region10: #{tpu_custom_call.1} parent=1 // pred_check
      _
    $region11: #{tpu_custom_call.1} parent=1 // pred_check_branch
      %29 = sbr.rel (0) target = $region13
    $region12: #{tpu_custom_call.1} parent=1 // pred_region
      // Predicated region
      $region14: #{tpu_custom_call.1} parent=12 // pred_check
        _
      $region15: #{tpu_custom_call.1} parent=12 // pred_check_branch
        %31 = sbr.rel (0) target = $region17
      $region16: #{tpu_custom_call.1} parent=12 // pred_region
        // Predicated region
        $region18: #{tpu_custom_call.1} parent=16 // pred_check
          _
        $region19: #{tpu_custom_call.1} parent=16 // pred_check_branch
          %33 = sbr.rel target = $region21
        $region20: #{tpu_custom_call.1} parent=16 // pred_region
          // Predicated region
          $region33: #{tpu_custom_call.1} parent=20 // pred_check
            _
          $region34: #{tpu_custom_call.1} parent=20 // pred_check_branch
            %51 = sbr.rel (0) target = $region36
          $region35: #{tpu_custom_call.1} parent=20 // pred_region
            loop: start=0, step=1, limit=1
            $region37: #{tpu_custom_call.1} parent=35 // loop_pre_header
              _
            $region38: #{tpu_custom_call.1} parent=35 // loop_header
              %s53 = sphi 0, %s57
              %p54 = scmp.ge.s32.totalorder %s53, 1
              %s58 = sphi %s2, %s2
              %s59 = sphi [#allocation6], [#allocation6]
            $region39: #{tpu_custom_call.1} parent=35 // loop_header_branch
              %56 = sbr.rel (%p54) target = $region43
            $region40: #{tpu_custom_call.1} parent=35 // loop_body
              _
            $region41: #{tpu_custom_call.1} parent=35 // loop_footer
              %s57 = sadd.s32 1, %s53
            $region42: #{tpu_custom_call.1} parent=35 // loop_footer_branch
              %52 = sbr.rel target = $region38
            $region43: #{tpu_custom_call.1} parent=35 // loop_exit
              _
            %s61 = ssub.s32 16, 1
            loop: start=0, step=1, limit=1
            $region44: #{tpu_custom_call.1} parent=35 // loop_pre_header
              _
            $region45: #{tpu_custom_call.1} parent=35 // loop_header
              %s63 = sphi 0, %s67
              %p64 = scmp.ge.s32.totalorder %s63, 1
              %s68 = sphi %s2, %s2
              %s69 = sphi [#allocation6], [#allocation6]
            $region46: #{tpu_custom_call.1} parent=35 // loop_header_branch
              %66 = sbr.rel (%p64) target = $region50
            $region47: #{tpu_custom_call.1} parent=35 // loop_body
              %v70 = vld [vmem:[%s68] sm:%s61]
              %71 = vst [vmem:[%s69] sm:%s61] %v70
              %v72 = vld [vmem:[%s68 + $0x4] sm:%s61]
              %73 = vst [vmem:[%s69 + $0x8] sm:%s61] %v72
            $region48: #{tpu_custom_call.1} parent=35 // loop_footer
              %s67 = sadd.s32 1, %s63
            $region49: #{tpu_custom_call.1} parent=35 // loop_footer_branch
              %62 = sbr.rel target = $region45
            $region50: #{tpu_custom_call.1} parent=35 // loop_exit
              _
          $region36: #{tpu_custom_call.1} parent=20 // pred_fallthru
            _
        $region21: #{tpu_custom_call.1} parent=16 // pred_fallthru
          _
        // Predicated region
        $region22: #{tpu_custom_call.1} parent=16 // pred_check
          _
        $region23: #{tpu_custom_call.1} parent=16 // pred_check_branch
          %35 = sbr.rel (0) target = $region25
        $region24: #{tpu_custom_call.1} parent=16 // pred_region
          %s37 = ssub.s32 16, 1
          loop: start=0, step=1, limit=1
          $region26: #{tpu_custom_call.1} parent=24 // loop_pre_header
            _
          $region27: #{tpu_custom_call.1} parent=24 // loop_header
            %s39 = sphi 0, %s43
            %p40 = scmp.ge.s32.totalorder %s39, 1
            %s44 = sphi %s2, %s2
            %s45 = sphi [#allocation6], [#allocation6]
          $region28: #{tpu_custom_call.1} parent=24 // loop_header_branch
            %42 = sbr.rel (%p40) target = $region32
          $region29: #{tpu_custom_call.1} parent=24 // loop_body
            %v46 = vld [vmem:[%s44] sm:%s37]
            %47 = vst [vmem:[%s45] sm:%s37] %v46
            %v48 = vld [vmem:[%s44 + $0x4] sm:%s37]
            %49 = vst [vmem:[%s45 + $0x8] sm:%s37] %v48
          $region30: #{tpu_custom_call.1} parent=24 // loop_footer
            %s43 = sadd.s32 1, %s39
          $region31: #{tpu_custom_call.1} parent=24 // loop_footer_branch
            %38 = sbr.rel target = $region27
          $region32: #{tpu_custom_call.1} parent=24 // loop_exit
            _
        $region25: #{tpu_custom_call.1} parent=16 // pred_fallthru
          _
      $region17: #{tpu_custom_call.1} parent=12 // pred_fallthru
        _
      %74 = vnop
    $region13: #{tpu_custom_call.1} parent=1 // pred_fallthru
      _
    // Predicated region
    $region51: #{tpu_custom_call.1} parent=1 // pred_check
      _
    $region52: #{tpu_custom_call.1} parent=1 // pred_check_branch
      %76 = sbr.rel (0) target = $region54
    $region53: #{tpu_custom_call.1} parent=1 // pred_region
      %78 = dma.done [#allocation3], 16
    $region54: #{tpu_custom_call.1} parent=1 // pred_fallthru
      _
    // Predicated region
    $region55: #{tpu_custom_call.1} parent=1 // pred_check
      _
    $region56: #{tpu_custom_call.1} parent=1 // pred_check_branch
      %80 = sbr.rel (0) target = $region58
    $region57: #{tpu_custom_call.1} parent=1 // pred_region
      %82 = dma.done [#allocation5], 16
    $region58: #{tpu_custom_call.1} parent=1 // pred_fallthru
      _
    // Predicated region
    $region59: #{tpu_custom_call.1} parent=1 // pred_check
      _
    $region60: #{tpu_custom_call.1} parent=1 // pred_check_branch
      %84 = sbr.rel (0) target = $region62
    $region61: #{tpu_custom_call.1} parent=1 // pred_region
      _
    $region62: #{tpu_custom_call.1} parent=1 // pred_fallthru
      _
    %85 = sfence
    %v86 = vld [vmem:[#allocation6] sm:$0xff]
    %v87 = vld [vmem:[#allocation6 + $0x8] sm:$0xff]
    %s88 = sld [smem:[#allocation2]]
    %s89 = sld [smem:[#allocation2 + $0x1]]
    %s90 = sld [smem:[#allocation2 + $0x2]]
    %s91 = sld [smem:[#allocation2 + $0x3]]
    %s92 = sld [smem:[#allocation4]]
    %s93 = sld [smem:[#allocation4 + $0x1]]
    %v94 = vstv %s88
    %v95 = vmul.f32 %v94, %v86
    %v96 = vstv %s89
    %v97 = vmul.f32 %v96, %v87
    %v98 = vadd.f32 %v95, %v97
    %v99 = vand.u32 2147483647, %v98
    %vm100 = vcmp.le.f32.partialorder %v99, 0.7853982
    %vm101 = vcmp.lt.s32.totalorder %v98, 0
    %v102 = vand.u32 %v98, 2139095040
    %v103 = vshrl.u32 %v102, 23
    %v104 = vsub.s32 %v103, 127
    %v105 = vand.u32 2147483647, %v98
    %v106 = vand.u32 %v105, 8388607
    %v107 = vor.u32 %v106, 8388608
    %v108 = vsub.s32 0, %v107
    %v109 = vadd.s32 %v104, 1
    %vm110 = vcmp.gt.s32.totalorder %v109, 0
    %v111 = vsel %vm110, %v109, 0
    %v112 = vshrl.u32 %v111, 5
    %v113 = vand.u32 %v111, 31
    %v114 = vsub.s32 32, %v113
    %v115 = vshrl.u32 683565275, %v114
    %v116 = vshll.u32 683565275, %v113
    %v117 = vshrl.u32 2475754826, %v114
    %v118 = vor.u32 %v116, %v117
    %v119 = vshll.u32 2475754826, %v113
    %v120 = vshrl.u32 2131351028, %v114
    %v121 = vor.u32 %v119, %v120
    %v122 = vshll.u32 2131351028, %v113
    %v123 = vshrl.u32 2102212464, %v114
    %v124 = vor.u32 %v122, %v123
    %v125 = vshll.u32 2102212464, %v113
    %v126 = vshrl.u32 920167782, %v114
    %v127 = vor.u32 %v125, %v126
    %v128 = vshll.u32 920167782, %v113
    %v129 = vshrl.u32 1326507024, %v114
    %v130 = vor.u32 %v128, %v129
    %vm131 = vcmp.lt.s32.totalorder %v112, 1
    %vm132 = vcmp.lt.s32.totalorder %v112, 2
    %vm133 = vcmp.lt.s32.totalorder %v112, 3
    %vm134 = vcmp.lt.s32.totalorder %v112, 4
    %v135 = vsel %vm131, %v115, %v118
    %v136 = vsel %vm134, %v124, 2102212464
    %v137 = vsel %vm133, %v121, %v136
    %v138 = vsel %vm132, %v135, %v137
    %v139 = vsel %vm131, %v118, %v121
    %v140 = vsel %vm134, %v127, 920167782
    %v141 = vsel %vm133, %v124, %v140
    %v142 = vsel %vm132, %v139, %v141
    %v143 = vsel %vm131, %v121, %v124
    %v144 = vsel %vm134, %v130, 1326507024
    %v145 = vsel %vm133, %v127, %v144
    %v146 = vsel %vm132, %v143, %v145
    %v147 = vshll.u32 %v107, 8
    %v148 = vand.u32 %v147, 65535
    %v149 = vshrl.u32 %v147, 16
    %v150 = vand.u32 %v146, 65535
    %v151 = vshrl.u32 %v146, 16
    %v152 = vmul.u32 %v148, %v150
    %v153 = vmul.u32 %v148, %v151
    %v154 = vmul.u32 %v149, %v150
    %v155 = vmul.u32 %v149, %v151
    %v156 = vshll.u32 %v153, 16
    %v157 = vshrl.u32 %v153, 16
    %v158 = vshll.u32 %v154, 16
    %v159 = vshrl.u32 %v154, 16
    %vm160 = vc.u32 %v152, %v156
    %v161 = vsel %vm160, 1, 0
    %v162 = vadd.s32 %v152, %v156
    %v163 = vadd.s32 %v155, %v161
    %vm164 = vc.u32 %v162, %v158
    %v165 = vsel %vm164, 1, 0
    %v166 = vadd.s32 %v162, %v158
    %v167 = vadd.s32 %v163, %v165
    %v168 = vadd.s32 %v167, %v157
    %v169 = vadd.s32 %v168, %v159
    %v170 = vand.u32 %v147, 65535
    %v171 = vshrl.u32 %v147, 16
    %v172 = vand.u32 %v142, 65535
    %v173 = vshrl.u32 %v142, 16
    %v174 = vmul.u32 %v170, %v172
    %v175 = vmul.u32 %v170, %v173
    %v176 = vmul.u32 %v171, %v172
    %v177 = vmul.u32 %v171, %v173
    %v178 = vshll.u32 %v175, 16
    %v179 = vshrl.u32 %v175, 16
    %v180 = vshll.u32 %v176, 16
    %v181 = vshrl.u32 %v176, 16
    %vm182 = vc.u32 %v174, %v178
    %v183 = vsel %vm182, 1, 0
    %v184 = vadd.s32 %v174, %v178
    %v185 = vadd.s32 %v177, %v183
    %vm186 = vc.u32 %v184, %v180
    %v187 = vsel %vm186, 1, 0
    %v188 = vadd.s32 %v184, %v180
    %v189 = vadd.s32 %v185, %v187
    %v190 = vadd.s32 %v189, %v179
    %v191 = vadd.s32 %v190, %v181
    %v192 = vmul.u32 %v147, %v138
    %v193 = vadd.s32 %v169, %v188
    %vm194 = vc.u32 %v169, %v188
    %v195 = vadd.s32 %v191, 1
    %v196 = vsel %vm194, %v195, %v191
    %v197 = vadd.s32 %v192, %v196
    %v198 = vadd.s32 %v197, 536870912
    %v199 = vshrl.u32 %v198, 30
    %v200 = vshll.u32 %v199, 30
    %v201 = vsub.s32 %v197, %v200
    %vm202 = vcmp.lt.s32.totalorder %v201, 0
    %v203 = vsub.s32 0, %v201
    %v204 = vsel %vm202, %v203, %v201
    %v205 = vclz %v204
    %v206 = vsub.s32 %v205, 2
    %vm207 = vcmp.gt.s32.totalorder 0, %v206
    %v208 = vsel %vm207, 0, %v206
    %v209 = vsub.s32 32, %v208
    %v210 = vshll.u32 %v201, %v208
    %v211 = vshrl.u32 %v193, %v209
    %v212 = vor.u32 %v210, %v211
    %v213 = vsub.s32 4294967266, %v208
    %v214 = vadd.s32 %v213, 127
    %v215 = vshll.u32 %v214, 23
    %v216 = vor.u32 4788187, %v215
    %v217 = vand.u32 2147483647, %v216
    %v219 = vcvt.s32.f32 %v212
    %v220 = vmul.f32 %v219, %v217
    %v221 = vxor.u32 %v220, 2147483648
    %v222 = vsel %vm101, %v221, %v220
    %v223 = vsub.s32 4, %v199
    %v224 = vsel %vm101, %v223, %v199
    %v225 = vsel %vm100, %v98, %v222
    %v226 = vsel %vm100, 0, %v224
    %v227 = vmul.f32 %v225, %v225
    %v228 = vmul.f32 %v227, -0.001358992
    %v229 = vadd.f32 %v228, 0.041655596
    %v230 = vmul.f32 %v227, %v229
    %v231 = vadd.f32 %v230, -0.4999988
    %v232 = vmul.f32 %v227, %v231
    %v233 = vadd.f32 1.0, %v232
    %v234 = vmul.f32 %v225, %v225
    %v235 = vmul.f32 %v234, -0.00019511016
    %v236 = vadd.f32 %v235, 0.008332121
    %v237 = vmul.f32 %v234, %v236
    %v238 = vadd.f32 %v237, -0.16666654
    %v239 = vmul.f32 %v234, %v238
    %v240 = vadd.f32 %v239, 1.0
    %v241 = vmul.f32 %v240, %v225
    %vm242 = vweird.f32 %v98
    %v243 = vadd.s32 %v226, 3
    %v244 = vand.u32 %v243, 3
    %vm245 = vcmp.lt.s32.totalorder %v244, 2
    %vm246 = vcmp.eq.s32.totalorder %v244, 0
    %v247 = vxor.u32 %v241, 2147483648
    %v248 = vsel %vm246, %v233, %v247
    %vm249 = vcmp.eq.s32.totalorder %v244, 2
    %v250 = vxor.u32 %v233, 2147483648
    %v251 = vsel %vm249, %v250, %v241
    %v252 = vsel %vm245, %v248, %v251
    %v253 = vsel %vm242, nan, %v252
    %v254 = vstv %s92
    %v255 = vmul.f32 %v253, %v254
    %256 = vst [vmem:[#allocation7] sm:$0xff] %v255
    %v257 = vstv %s90
    %v258 = vmul.f32 %v257, %v86
    %v259 = vstv %s91
    %v260 = vmul.f32 %v259, %v87
    %v261 = vadd.f32 %v258, %v260
    %v262 = vand.u32 2147483647, %v261
    %vm263 = vcmp.le.f32.partialorder %v262, 0.7853982
    %vm264 = vcmp.lt.s32.totalorder %v261, 0
    %v265 = vand.u32 %v261, 2139095040
    %v266 = vshrl.u32 %v265, 23
    %v267 = vsub.s32 %v266, 127
    %v268 = vand.u32 2147483647, %v261
    %v269 = vand.u32 %v268, 8388607
    %v270 = vor.u32 %v269, 8388608
    %v271 = vsub.s32 0, %v270
    %v272 = vadd.s32 %v267, 1
    %vm273 = vcmp.gt.s32.totalorder %v272, 0
    %v274 = vsel %vm273, %v272, 0
    %v275 = vshrl.u32 %v274, 5
    %v276 = vand.u32 %v274, 31
    %v277 = vsub.s32 32, %v276
    %v278 = vshrl.u32 683565275, %v277
    %v279 = vshll.u32 683565275, %v276
    %v280 = vshrl.u32 2475754826, %v277
    %v281 = vor.u32 %v279, %v280
    %v282 = vshll.u32 2475754826, %v276
    %v283 = vshrl.u32 2131351028, %v277
    %v284 = vor.u32 %v282, %v283
    %v285 = vshll.u32 2131351028, %v276
    %v286 = vshrl.u32 2102212464, %v277
    %v287 = vor.u32 %v285, %v286
    %v288 = vshll.u32 2102212464, %v276
    %v289 = vshrl.u32 920167782, %v277
    %v290 = vor.u32 %v288, %v289
    %v291 = vshll.u32 920167782, %v276
    %v292 = vshrl.u32 1326507024, %v277
    %v293 = vor.u32 %v291, %v292
    %vm294 = vcmp.lt.s32.totalorder %v275, 1
    %vm295 = vcmp.lt.s32.totalorder %v275, 2
    %vm296 = vcmp.lt.s32.totalorder %v275, 3
    %vm297 = vcmp.lt.s32.totalorder %v275, 4
    %v298 = vsel %vm294, %v278, %v281
    %v299 = vsel %vm297, %v287, 2102212464
    %v300 = vsel %vm296, %v284, %v299
    %v301 = vsel %vm295, %v298, %v300
    %v302 = vsel %vm294, %v281, %v284
    %v303 = vsel %vm297, %v290, 920167782
    %v304 = vsel %vm296, %v287, %v303
    %v305 = vsel %vm295, %v302, %v304
    %v306 = vsel %vm294, %v284, %v287
    %v307 = vsel %vm297, %v293, 1326507024
    %v308 = vsel %vm296, %v290, %v307
    %v309 = vsel %vm295, %v306, %v308
    %v310 = vshll.u32 %v270, 8
    %v311 = vand.u32 %v310, 65535
    %v312 = vshrl.u32 %v310, 16
    %v313 = vand.u32 %v309, 65535
    %v314 = vshrl.u32 %v309, 16
    %v315 = vmul.u32 %v311, %v313
    %v316 = vmul.u32 %v311, %v314
    %v317 = vmul.u32 %v312, %v313
    %v318 = vmul.u32 %v312, %v314
    %v319 = vshll.u32 %v316, 16
    %v320 = vshrl.u32 %v316, 16
    %v321 = vshll.u32 %v317, 16
    %v322 = vshrl.u32 %v317, 16
    %vm323 = vc.u32 %v315, %v319
    %v324 = vsel %vm323, 1, 0
    %v325 = vadd.s32 %v315, %v319
    %v326 = vadd.s32 %v318, %v324
    %vm327 = vc.u32 %v325, %v321
    %v328 = vsel %vm327, 1, 0
    %v329 = vadd.s32 %v325, %v321
    %v330 = vadd.s32 %v326, %v328
    %v331 = vadd.s32 %v330, %v320
    %v332 = vadd.s32 %v331, %v322
    %v333 = vand.u32 %v310, 65535
    %v334 = vshrl.u32 %v310, 16
    %v335 = vand.u32 %v305, 65535
    %v336 = vshrl.u32 %v305, 16
    %v337 = vmul.u32 %v333, %v335
    %v338 = vmul.u32 %v333, %v336
    %v339 = vmul.u32 %v334, %v335
    %v340 = vmul.u32 %v334, %v336
    %v341 = vshll.u32 %v338, 16
    %v342 = vshrl.u32 %v338, 16
    %v343 = vshll.u32 %v339, 16
    %v344 = vshrl.u32 %v339, 16
    %vm345 = vc.u32 %v337, %v341
    %v346 = vsel %vm345, 1, 0
    %v347 = vadd.s32 %v337, %v341
    %v348 = vadd.s32 %v340, %v346
    %vm349 = vc.u32 %v347, %v343
    %v350 = vsel %vm349, 1, 0
    %v351 = vadd.s32 %v347, %v343
    %v352 = vadd.s32 %v348, %v350
    %v353 = vadd.s32 %v352, %v342
    %v354 = vadd.s32 %v353, %v344
    %v355 = vmul.u32 %v310, %v301
    %v356 = vadd.s32 %v332, %v351
    %vm357 = vc.u32 %v332, %v351
    %v358 = vadd.s32 %v354, 1
    %v359 = vsel %vm357, %v358, %v354
    %v360 = vadd.s32 %v355, %v359
    %v361 = vadd.s32 %v360, 536870912
    %v362 = vshrl.u32 %v361, 30
    %v363 = vshll.u32 %v362, 30
    %v364 = vsub.s32 %v360, %v363
    %vm365 = vcmp.lt.s32.totalorder %v364, 0
    %v366 = vsub.s32 0, %v364
    %v367 = vsel %vm365, %v366, %v364
    %v368 = vclz %v367
    %v369 = vsub.s32 %v368, 2
    %vm370 = vcmp.gt.s32.totalorder 0, %v369
    %v371 = vsel %vm370, 0, %v369
    %v372 = vsub.s32 32, %v371
    %v373 = vshll.u32 %v364, %v371
    %v374 = vshrl.u32 %v356, %v372
    %v375 = vor.u32 %v373, %v374
    %v376 = vsub.s32 4294967266, %v371
    %v377 = vadd.s32 %v376, 127
    %v378 = vshll.u32 %v377, 23
    %v379 = vor.u32 4788187, %v378
    %v380 = vand.u32 2147483647, %v379
    %v382 = vcvt.s32.f32 %v375
    %v383 = vmul.f32 %v382, %v380
    %v384 = vxor.u32 %v383, 2147483648
    %v385 = vsel %vm264, %v384, %v383
    %v386 = vsub.s32 4, %v362
    %v387 = vsel %vm264, %v386, %v362
    %v388 = vsel %vm263, %v261, %v385
    %v389 = vsel %vm263, 0, %v387
    %v390 = vmul.f32 %v388, %v388
    %v391 = vmul.f32 %v390, -0.001358992
    %v392 = vadd.f32 %v391, 0.041655596
    %v393 = vmul.f32 %v390, %v392
    %v394 = vadd.f32 %v393, -0.4999988
    %v395 = vmul.f32 %v390, %v394
    %v396 = vadd.f32 1.0, %v395
    %v397 = vmul.f32 %v388, %v388
    %v398 = vmul.f32 %v397, -0.00019511016
    %v399 = vadd.f32 %v398, 0.008332121
    %v400 = vmul.f32 %v397, %v399
    %v401 = vadd.f32 %v400, -0.16666654
    %v402 = vmul.f32 %v397, %v401
    %v403 = vadd.f32 %v402, 1.0
    %v404 = vmul.f32 %v403, %v388
    %vm405 = vweird.f32 %v261
    %v406 = vadd.s32 %v389, 3
    %v407 = vand.u32 %v406, 3
    %vm408 = vcmp.lt.s32.totalorder %v407, 2
    %vm409 = vcmp.eq.s32.totalorder %v407, 0
    %v410 = vxor.u32 %v404, 2147483648
    %v411 = vsel %vm409, %v396, %v410
    %vm412 = vcmp.eq.s32.totalorder %v407, 2
    %v413 = vxor.u32 %v396, 2147483648
    %v414 = vsel %vm412, %v413, %v404
    %v415 = vsel %vm408, %v411, %v414
    %v416 = vsel %vm405, nan, %v415
    %v417 = vstv %s93
    %v418 = vmul.f32 %v416, %v417
    %s419 = scalar_lea.vmem [#allocation7], 8
    %420 = vst [vmem:[%s419] sm:$0xff] %v418
    %s421 = scalar_lea.vmem [#allocation7], 16
    %422 = vst [vmem:[%s421] sm:$0xff] %v86
    %423 = vst [vmem:[%s421 + $0x8] sm:$0xff] %v87
    // Predicated region
    $region63: #{tpu_custom_call.1} parent=1 // pred_check
      _
    $region64: #{tpu_custom_call.1} parent=1 // pred_check_branch
      %425 = sbr.rel (0) target = $region66
    $region65: #{tpu_custom_call.1} parent=1 // pred_region
      // Predicated region
      $region67: #{tpu_custom_call.1} parent=65 // pred_check
        _
      $region68: #{tpu_custom_call.1} parent=65 // pred_check_branch
        %427 = sbr.rel (0) target = $region70
      $region69: #{tpu_custom_call.1} parent=65 // pred_region
        // Predicated region
        $region71: #{tpu_custom_call.1} parent=69 // pred_check
          _
        $region72: #{tpu_custom_call.1} parent=69 // pred_check_branch
          %429 = sbr.rel target = $region74
        $region73: #{tpu_custom_call.1} parent=69 // pred_region
          // Predicated region
          $region86: #{tpu_custom_call.1} parent=73 // pred_check
            _
          $region87: #{tpu_custom_call.1} parent=73 // pred_check_branch
            %451 = sbr.rel (0) target = $region89
          $region88: #{tpu_custom_call.1} parent=73 // pred_region
            loop: start=0, step=1, limit=1
            $region90: #{tpu_custom_call.1} parent=88 // loop_pre_header
              _
            $region91: #{tpu_custom_call.1} parent=88 // loop_header
              %s453 = sphi 0, %s457
              %p454 = scmp.ge.s32.totalorder %s453, 1
              %s458 = sphi [#allocation7], [#allocation7]
              %s459 = sphi %s3, %s3
            $region92: #{tpu_custom_call.1} parent=88 // loop_header_branch
              %456 = sbr.rel (%p454) target = $region96
            $region93: #{tpu_custom_call.1} parent=88 // loop_body
              _
            $region94: #{tpu_custom_call.1} parent=88 // loop_footer
              %s457 = sadd.s32 1, %s453
            $region95: #{tpu_custom_call.1} parent=88 // loop_footer_branch
              %452 = sbr.rel target = $region91
            $region96: #{tpu_custom_call.1} parent=88 // loop_exit
              _
            %s461 = ssub.s32 16, 1
            loop: start=0, step=1, limit=1
            $region97: #{tpu_custom_call.1} parent=88 // loop_pre_header
              _
            $region98: #{tpu_custom_call.1} parent=88 // loop_header
              %s463 = sphi 0, %s467
              %p464 = scmp.ge.s32.totalorder %s463, 1
              %s468 = sphi [#allocation7], [#allocation7]
              %s469 = sphi %s3, %s3
            $region99: #{tpu_custom_call.1} parent=88 // loop_header_branch
              %466 = sbr.rel (%p464) target = $region103
            $region100: #{tpu_custom_call.1} parent=88 // loop_body
              %v470 = vld [vmem:[%s468] sm:%s461]
              %471 = vst [vmem:[%s469] sm:%s461] %v470
              %v472 = vld [vmem:[%s468 + $0x8] sm:%s461]
              %473 = vst [vmem:[%s469 + $0x4] sm:%s461] %v472
              %v474 = vld [vmem:[%s468 + $0x10] sm:%s461]
              %475 = vst [vmem:[%s469 + $0x8] sm:%s461] %v474
              %v476 = vld [vmem:[%s468 + $0x18] sm:%s461]
              %477 = vst [vmem:[%s469 + $0xc] sm:%s461] %v476
            $region101: #{tpu_custom_call.1} parent=88 // loop_footer
              %s467 = sadd.s32 1, %s463
            $region102: #{tpu_custom_call.1} parent=88 // loop_footer_branch
              %462 = sbr.rel target = $region98
            $region103: #{tpu_custom_call.1} parent=88 // loop_exit
              _
          $region89: #{tpu_custom_call.1} parent=73 // pred_fallthru
            _
        $region74: #{tpu_custom_call.1} parent=69 // pred_fallthru
          _
        // Predicated region
        $region75: #{tpu_custom_call.1} parent=69 // pred_check
          _
        $region76: #{tpu_custom_call.1} parent=69 // pred_check_branch
          %431 = sbr.rel (0) target = $region78
        $region77: #{tpu_custom_call.1} parent=69 // pred_region
          %s433 = ssub.s32 16, 1
          loop: start=0, step=1, limit=1
          $region79: #{tpu_custom_call.1} parent=77 // loop_pre_header
            _
          $region80: #{tpu_custom_call.1} parent=77 // loop_header
            %s435 = sphi 0, %s439
            %p436 = scmp.ge.s32.totalorder %s435, 1
            %s440 = sphi [#allocation7], [#allocation7]
            %s441 = sphi %s3, %s3
          $region81: #{tpu_custom_call.1} parent=77 // loop_header_branch
            %438 = sbr.rel (%p436) target = $region85
          $region82: #{tpu_custom_call.1} parent=77 // loop_body
            %v442 = vld [vmem:[%s440] sm:%s433]
            %443 = vst [vmem:[%s441] sm:%s433] %v442
            %v444 = vld [vmem:[%s440 + $0x8] sm:%s433]
            %445 = vst [vmem:[%s441 + $0x4] sm:%s433] %v444
            %v446 = vld [vmem:[%s440 + $0x10] sm:%s433]
            %447 = vst [vmem:[%s441 + $0x8] sm:%s433] %v446
            %v448 = vld [vmem:[%s440 + $0x18] sm:%s433]
            %449 = vst [vmem:[%s441 + $0xc] sm:%s433] %v448
          $region83: #{tpu_custom_call.1} parent=77 // loop_footer
            %s439 = sadd.s32 1, %s435
          $region84: #{tpu_custom_call.1} parent=77 // loop_footer_branch
            %434 = sbr.rel target = $region80
          $region85: #{tpu_custom_call.1} parent=77 // loop_exit
            _
        $region78: #{tpu_custom_call.1} parent=69 // pred_fallthru
          _
      $region70: #{tpu_custom_call.1} parent=65 // pred_fallthru
        _
      %478 = vnop
    $region66: #{tpu_custom_call.1} parent=1 // pred_fallthru
      _
    // Predicated region
    $region104: #{tpu_custom_call.1} parent=1 // pred_check
      _
    $region105: #{tpu_custom_call.1} parent=1 // pred_check_branch
      %480 = sbr.rel (0) target = $region107
    $region106: #{tpu_custom_call.1} parent=1 // pred_region
      _
    $region107: #{tpu_custom_call.1} parent=1 // pred_fallthru
      _
    %481 = vsyncpa [#allocation3], 1
    %482 = vsyncpa [#allocation5], 1

</llo_original>
